<compile_context>
chip_gen: v5e
topology: v5e:2x2
jax: 0.10.0
libtpu: 0.0.40
codegen_flags: <defaults>
</compile_context>

<pallas_src>
import jax
import jax.numpy as jnp
from jax.experimental import pallas as pl
from jax.experimental.pallas import tpu as pltpu


def _identity_kernel(x_ref, o_ref):
    """Pass-through: copy the current (TILE_N, C) VMEM tile to the output tile."""
    o_ref[...] = x_ref[...]


def _tile_rows(n_rows, n_cols, itemsize, *, max_rows=1024,
               vmem_budget_bytes=8 * 1024 * 1024):
    """Pick a row-tile size.

    Budget: 2 double-buffered input tiles + 2 output tiles must stay well under
    the default scoped VMEM limit (16 MiB v5e / 32 MiB v6e,v7x; 64 MiB physical
    on v7x).  Columns are counted lane-padded to 128.
    """
    if n_rows <= max_rows:
        return n_rows  # single block == full array dim (always a legal block shape)
    padded_cols = ((n_cols + 127) // 128) * 128
    tile = max_rows  # multiple of 8; halving preserves that down to 8
    while tile > 8 and 4 * tile * padded_cols * itemsize > vmem_budget_bytes:
        tile //= 2
    return tile


def pallas_identity(a, *, max_tile_rows=1024):
    """Route a 2-D array through a row-tiled Pallas pass-through kernel."""
    n, c = a.shape
    tile = _tile_rows(n, c, a.dtype.itemsize, max_rows=max_tile_rows)
    grid = (pl.cdiv(n, tile),)
    in_spec = pl.BlockSpec((tile, c), lambda i: (i, 0))
    out_spec = pl.BlockSpec((tile, c), lambda i: (i, 0))
    return pl.pallas_call(
        _identity_kernel,
        out_shape=jax.ShapeDtypeStruct((n, c), a.dtype),
        grid=grid,
        in_specs=[in_spec],
        out_specs=out_spec,
        compiler_params=pltpu.CompilerParams(
            dimension_semantics=("parallel",),      # row tiles are independent
            vmem_limit_bytes=32 * 1024 * 1024,
        ),
        cost_estimate=pl.CostEstimate(
            flops=0,
            transcendentals=0,
            bytes_accessed=2 * n * c * a.dtype.itemsize,
        ),
    )(a)


def identity_forward(data):
    """Identity.forward(data) -> data.

    Array leaves (x, pos) are routed through the Pallas pass-through kernel to
    express the forward as a TPU kernel; the integer batch-id vector is passed
    through at the JAX level — an (N,1) int32 VMEM stream would DMA 128 lanes
    of padding per 4 useful bytes (per the review) and an identity op gives
    nothing back for that traffic.
    """
    # TODO(synk): only 2-D array leaves are routed through the Pallas copy;
    # other Data attributes (batch ids, edge_index, ...) pass through unchanged
    # at the Python level, which is exactly what Identity.forward does anyway.
    out = dict(data)
    out["x"] = pallas_identity(data["x"])
    out["pos"] = pallas_identity(data["pos"])
    return out


if __name__ == "__main__":
    key = jax.random.PRNGKey(0)

    # Small point-cloud-style Data object (what Identity receives downstream of
    # the torch-points3d base modules): N points, 5 features, 3 pos dims, 2 graphs.
    N, F, B = 16, 5, 2
    kx, kp, k1, k2 = jax.random.split(key, 4)
    x = jax.random.normal(kx, (N, F), jnp.float32)
    pos = jax.random.normal(kp, (N, 3), jnp.float32)
    batch = jnp.repeat(jnp.arange(B, dtype=jnp.int32), N // B)

    data = {"x": x, "pos": pos, "batch": batch}
    out = identity_forward(data)
    out = {k: jax.block_until_ready(v) for k, v in out.items()}

    assert out["x"].shape == x.shape and out["x"].dtype == x.dtype
    assert out["pos"].shape == pos.shape and out["pos"].dtype == pos.dtype
    assert bool(jnp.array_equal(out["x"], x)), "x mismatch vs identity"
    assert bool(jnp.array_equal(out["pos"], pos)), "pos mismatch vs identity"
    assert bool(jnp.array_equal(out["batch"], batch)), "batch mismatch vs identity"

    # Exercise the tiled/pipelined path: multi-step grid with a ragged last row
    # tile, >128-column (lane-dense) blocks, and bf16 pass-through (no converts).
    y32 = jax.random.normal(k1, (2500, 130), jnp.float32)
    o32 = jax.block_until_ready(pallas_identity(y32))
    assert bool(jnp.array_equal(o32, y32)), "tiled f32 identity mismatch"

    y16 = jax.random.normal(k2, (2048, 256), jnp.float32).astype(jnp.bfloat16)
    o16 = jax.block_until_ready(pallas_identity(y16))
    assert o16.dtype == jnp.bfloat16
    assert bool(jnp.array_equal(o16, y16)), "tiled bf16 identity mismatch"

    print("KERNEL_OK")
</pallas_src>

<mosaic_0001>
module attributes {stable_mosaic.version = 11 : i64} {
  func.func @_identity_kernel(%arg0: i32, %arg1: memref<16x5xf32, #tpu.memory_space<vmem>>, %arg2: memref<16x5xf32, #tpu.memory_space<vmem>>) attributes {dimension_semantics = [#tpu.dimension_semantics<parallel>], iteration_bounds = array<i64: 1>, scalar_prefetch = 0 : i64, scratch_operands = 0 : i64, tpu.core_type = #tpu.core_type<tc>, window_params = [{transform_indices = @transform_0, window_bounds = array<i64: 16, 5>}, {transform_indices = @transform_1, window_bounds = array<i64: 16, 5>}]} {
    %c0 = arith.constant 0 : index
    %c0_0 = arith.constant 0 : index
    %0 = vector.load %arg1[%c0, %c0_0] : memref<16x5xf32, #tpu.memory_space<vmem>>, vector<16x5xf32>
    %c0_1 = arith.constant 0 : index
    %c0_2 = arith.constant 0 : index
    %1 = vector.load %arg2[%c0_1, %c0_2] : memref<16x5xf32, #tpu.memory_space<vmem>>, vector<16x5xf32>
    tpu.vector_store %arg2[%c0_1, %c0_2], %0 {strides = array<i32>} : memref<16x5xf32, #tpu.memory_space<vmem>>, vector<16x5xf32>,
    return
  }
  func.func @transform_0(%arg0: i32) -> (i32, i32) {
    %c0_i32 = arith.constant 0 : i32
    %c0_i32_0 = arith.constant 0 : i32
    return %arg0, %c0_i32 : i32, i32
  }
  func.func @transform_1(%arg0: i32) -> (i32, i32) {
    %c0_i32 = arith.constant 0 : i32
    %c0_i32_0 = arith.constant 0 : i32
    return %arg0, %c0_i32 : i32, i32
  }
}

</mosaic_0001>

<llo_original>
// kernel: tpu_custom_call.1
$region0: #{tpu_custom_call.1}
  #allocation0 [shape = 'u32[]', space=smem, size = 0x4, offset = 0x4, fixed_abs, tag = 'smem constant byte address 0x4 - core index']
  #allocation1 [shape = 'u32[72,128]{1,0:T(1,128)}', space=vmem, size = 0x9000, scoped, tag = 'internal scratch']
  %s0 = inlined_call_operand.vmem [shape: f32[16,5], index: 0, kind: input, shape index: {}]
  %s1 = inlined_call_operand.vmem [shape: f32[16,5], index: 1, kind: output, shape index: {}]
  %s2 = sld [smem:[#allocation0]]
  $region14: #{tpu_custom_call.1} parent=0
    _
  %s4 = ssub.s32 1, %s2
  %s5 = scalar_select 0, %s4, %s2
  // Predicated region
  $region2: #{tpu_custom_call.1} parent=0 // pred_check
    _
  $region3: #{tpu_custom_call.1} parent=0 // pred_check_branch
    %7 = sbr.rel (0) target = $region5
  $region4: #{tpu_custom_call.1} parent=0 // pred_region
    _
  $region5: #{tpu_custom_call.1} parent=0 // pred_fallthru
    _
  %v8 = vld [vmem:[%s0] sm:$0xff]
  %v9 = vld [vmem:[%s0 + $0x8] sm:$0xff]
  %vm10 = vcmask 39936
  %11 = vst.msk [vmem:[%s1] sm:$0xff] %vm10, %v8
  %12 = vst.msk [vmem:[%s1 + $0x8] sm:$0xff] %vm10, %v9
  // Predicated region
  $region6: #{tpu_custom_call.1} parent=0 // pred_check
    _
  $region7: #{tpu_custom_call.1} parent=0 // pred_check_branch
    %14 = sbr.rel (0) target = $region9
  $region8: #{tpu_custom_call.1} parent=0 // pred_region
    _
  $region9: #{tpu_custom_call.1} parent=0 // pred_fallthru
    _
  // Predicated region
  $region10: #{tpu_custom_call.1} parent=0 // pred_check
    _
  $region11: #{tpu_custom_call.1} parent=0 // pred_check_branch
    %16 = sbr.rel (0) target = $region13
  $region12: #{tpu_custom_call.1} parent=0 // pred_region
    _
  $region13: #{tpu_custom_call.1} parent=0 // pred_fallthru
    _

</llo_original>
